<compile_context>
chip_gen: v6e
topology: v6e:2x2x1
jax: 0.10.0
libtpu: 0.0.40
codegen_flags: <defaults>
</compile_context>

<pallas_src>
import functools

import jax
import jax.numpy as jnp
from jax.experimental import pallas as pl
from jax.experimental.pallas import tpu as pltpu

HIDDEN = 128


def dqn_kernel(x_ref, w_ref, b_ref, o_ref):
    # x_ref: (bm, n_obs) bf16   w_ref: (3, 128, 128) bf16
    # b_ref: (3, 1, 128) f32    o_ref: (bm, n_actions) f32
    n_obs = x_ref.shape[-1]
    n_act = o_ref.shape[-1]

    # layer1 + ReLU: contract only over the real n_obs rows of the packed w1.
    h1 = jnp.dot(x_ref[...], w_ref[0, :n_obs, :],
                 preferred_element_type=jnp.float32)
    h1 = jnp.maximum(h1 + b_ref[0], 0.0)

    # layer2 + ReLU
    h2 = jnp.dot(h1.astype(jnp.bfloat16), w_ref[1],
                 preferred_element_type=jnp.float32)
    h2 = jnp.maximum(h2 + b_ref[1], 0.0)

    # layer3 (no activation); compute full 128-wide MXU result, store only the
    # real n_actions lanes (narrow masked store -- HBM bytes dominate here).
    out = jnp.dot(h2.astype(jnp.bfloat16), w_ref[2],
                  preferred_element_type=jnp.float32) + b_ref[2]
    o_ref[...] = out[:, :n_act].astype(o_ref.dtype)


def init_dqn_params(key, n_observations, n_actions, hidden=HIDDEN):
    """Deterministic init mimicking torch.nn.Linear default U(-1/sqrt(fan_in), +)."""
    keys = jax.random.split(key, 6)

    def linear(kw, kb, fan_in, fan_out):
        bound = 1.0 / jnp.sqrt(jnp.float32(fan_in))
        w = jax.random.uniform(kw, (fan_in, fan_out), jnp.float32, -bound, bound)
        b = jax.random.uniform(kb, (fan_out,), jnp.float32, -bound, bound)
        return w, b

    w1, b1 = linear(keys[0], keys[1], n_observations, hidden)
    w2, b2 = linear(keys[2], keys[3], hidden, hidden)
    w3, b3 = linear(keys[4], keys[5], hidden, n_actions)
    return {"w1": w1, "b1": b1, "w2": w2, "b2": b2, "w3": w3, "b3": b3}


def pack_params(params, n_observations, n_actions, hidden=HIDDEN):
    """Pack the 6 parameter tensors into one bf16 weight blob + one f32 bias blob.

    w1 lives in rows [:n_observations] of slot 0 (the kernel slices exactly
    those rows); w3/b3 live in lanes [:n_actions] of slot 2 with zero padding
    elsewhere so any padded lanes remain inert."""
    assert n_observations <= hidden and n_actions <= hidden
    w_packed = jnp.zeros((3, hidden, hidden), jnp.bfloat16)
    w_packed = w_packed.at[0, :n_observations, :].set(params["w1"].astype(jnp.bfloat16))
    w_packed = w_packed.at[1, :, :].set(params["w2"].astype(jnp.bfloat16))
    w_packed = w_packed.at[2, :, :n_actions].set(params["w3"].astype(jnp.bfloat16))

    b_packed = jnp.zeros((3, 1, hidden), jnp.float32)
    b_packed = b_packed.at[0, 0, :].set(params["b1"])
    b_packed = b_packed.at[1, 0, :].set(params["b2"])
    b_packed = b_packed.at[2, 0, :n_actions].set(params["b3"])
    return w_packed, b_packed


def _round_up(v, m):
    return ((v + m - 1) // m) * m


@functools.partial(jax.jit, static_argnames=("n_actions",))
def dqn_forward(x, w_packed, b_packed, n_actions):
    """x: (B, n_observations) f32. Returns (B, n_actions) f32 Q-values."""
    B, n_obs = x.shape
    hidden = w_packed.shape[-1]

    # Adaptive batch tiling:
    #  - small batches (action selection / typical replay batches): one tile,
    #    launch latency dominates, no point splitting.
    #  - large batches: target ~4096 rows per tile, at least 2 tiles so the
    #    "parallel" grid axis shards across both v7x TensorCores; bm derived
    #    from cdiv so padding waste stays bounded (< 16 rows per tile).
    B8 = _round_up(max(B, 1), 8)
    if B8 <= 1024:
        n_tiles = 1
        bm = B8
    else:
        n_tiles = max(2, pl.cdiv(B8, 4096))
        bm = _round_up(pl.cdiv(B8, n_tiles), 16)
    B_pad = n_tiles * bm

    # Single prep op: cast to bf16 (and zero-pad batch rows only if needed).
    x_bf = x.astype(jnp.bfloat16)
    if B_pad != B:
        x_bf = jnp.pad(x_bf, ((0, B_pad - B), (0, 0)))

    flops = 2 * B_pad * hidden * (n_obs + hidden + hidden)
    bytes_accessed = (B_pad * n_obs * 2            # bf16 input
                      + w_packed.size * 2          # bf16 weights
                      + b_packed.size * 4          # f32 biases
                      + B_pad * n_actions * 4)     # f32 output

    out = pl.pallas_call(
        dqn_kernel,
        out_shape=jax.ShapeDtypeStruct((B_pad, n_actions), jnp.float32),
        grid=(n_tiles,),
        in_specs=[
            pl.BlockSpec((bm, n_obs), lambda i: (i, 0)),
            pl.BlockSpec((3, hidden, hidden), lambda i: (0, 0, 0)),
            pl.BlockSpec((3, 1, hidden), lambda i: (0, 0, 0)),
        ],
        out_specs=pl.BlockSpec((bm, n_actions), lambda i: (i, 0)),
        compiler_params=pltpu.CompilerParams(
            dimension_semantics=("parallel",)),
        cost_estimate=pl.CostEstimate(
            flops=int(flops), transcendentals=0,
            bytes_accessed=int(bytes_accessed)),
    )(x_bf, w_packed, b_packed)

    # Action dim is already exact; only slice batch padding when present.
    return out if B_pad == B else out[:B]


def dqn_reference(x, params):
    """Mirrors the kernel math (bf16 matmul operands, f32 accumulate/bias/ReLU)."""
    bf = lambda a: a.astype(jnp.bfloat16)
    h1 = jnp.maximum(
        jnp.dot(bf(x), bf(params["w1"]), preferred_element_type=jnp.float32)
        + params["b1"], 0.0)
    h2 = jnp.maximum(
        jnp.dot(bf(h1), bf(params["w2"]), preferred_element_type=jnp.float32)
        + params["b2"], 0.0)
    return (jnp.dot(bf(h2), bf(params["w3"]), preferred_element_type=jnp.float32)
            + params["b3"])


if __name__ == "__main__":
    # LunarLander-v2: 8 observations, 4 actions. Small replay-style batch.
    B, n_observations, n_actions = 8, 8, 4
    key = jax.random.PRNGKey(0)
    k_params, k_x = jax.random.split(key)
    params = init_dqn_params(k_params, n_observations, n_actions)
    w_packed, b_packed = pack_params(params, n_observations, n_actions)
    x = jax.random.normal(k_x, (B, n_observations), jnp.float32)

    out = dqn_forward(x, w_packed, b_packed, n_actions)
    jax.block_until_ready(out)

    ref = dqn_reference(x, params)
    assert out.shape == (B, n_actions), out.shape
    assert jnp.allclose(out, ref, atol=1e-3, rtol=1e-3), "mismatch vs reference"

    # Also exercise an odd, larger batch (multi-tile / padded path).
    B2 = 600
    x2 = jax.random.normal(jax.random.PRNGKey(1), (B2, n_observations), jnp.float32)
    out2 = dqn_forward(x2, w_packed, b_packed, n_actions)
    jax.block_until_ready(out2)
    ref2 = dqn_reference(x2, params)
    assert out2.shape == (B2, n_actions), out2.shape
    assert jnp.allclose(out2, ref2, atol=1e-3, rtol=1e-3), "mismatch vs reference (B=600)"

    print("KERNEL_OK")
</pallas_src>

<mosaic_0001>
module attributes {stable_mosaic.version = 11 : i64} {
  func.func @dqn_kernel(%arg0: i32, %arg1: memref<8x8xbf16, #tpu.memory_space<vmem>>, %arg2: memref<3x128x128xbf16, #tpu.memory_space<vmem>>, %arg3: memref<3x1x128xf32, #tpu.memory_space<vmem>>, %arg4: memref<8x4xf32, #tpu.memory_space<vmem>>) attributes {dimension_semantics = [#tpu.dimension_semantics<parallel>], iteration_bounds = array<i64: 1>, scalar_prefetch = 0 : i64, scratch_operands = 0 : i64, tpu.core_type = #tpu.core_type<tc>, window_params = [{transform_indices = @transform_0, window_bounds = array<i64: 8, 8>}, {pipeline_mode = #tpu.pipeline_mode<synchronous>, transform_indices = @transform_1, window_bounds = array<i64: 3, 128, 128>}, {pipeline_mode = #tpu.pipeline_mode<synchronous>, transform_indices = @transform_2, window_bounds = array<i64: 3, 1, 128>}, {transform_indices = @transform_3, window_bounds = array<i64: 8, 4>}]} {
    %c0 = arith.constant 0 : index
    %c0_0 = arith.constant 0 : index
    %0 = vector.load %arg1[%c0, %c0_0] : memref<8x8xbf16, #tpu.memory_space<vmem>>, vector<8x8xbf16>
    %c0_1 = arith.constant 0 : index
    %c0_2 = arith.constant 0 : index
    %c0_3 = arith.constant 0 : index
    %1 = vector.load %arg2[%c0_1, %c0_2, %c0_3] : memref<3x128x128xbf16, #tpu.memory_space<vmem>>, vector<1x8x128xbf16>
    %2 = vector.shape_cast %1 : vector<1x8x128xbf16> to vector<8x128xbf16>
    %cst = arith.constant dense<0.000000e+00> : vector<8x128xf32>
    %3 = tpu.matmul %0, %2, %cst {dimension_numbers = #tpu.dot_dimension_numbers<[1], [0], [0], [1], [0, 0, 1, 1], [], []>} : vector<8x8xbf16>, vector<8x128xbf16>, vector<8x128xf32> -> vector<8x128xf32>
    %c0_4 = arith.constant 0 : index
    %c0_5 = arith.constant 0 : index
    %c0_6 = arith.constant 0 : index
    %4 = vector.load %arg3[%c0_4, %c0_5, %c0_6] : memref<3x1x128xf32, #tpu.memory_space<vmem>>, vector<1x1x128xf32>
    %5 = vector.shape_cast %4 : vector<1x1x128xf32> to vector<1x128xf32>
    %6 = vector.broadcast %5 : vector<1x128xf32> to vector<8x128xf32>
    %7 = arith.addf %3, %6 : vector<8x128xf32>
    %cst_7 = arith.constant 0.000000e+00 : f32
    %8 = vector.broadcast %cst_7 : f32 to vector<8x128xf32>
    %9 = arith.maximumf %7, %8 : vector<8x128xf32>
    %10 = arith.truncf %9 : vector<8x128xf32> to vector<8x128xbf16>
    %c1 = arith.constant 1 : index
    %c0_8 = arith.constant 0 : index
    %c0_9 = arith.constant 0 : index
    %11 = vector.load %arg2[%c1, %c0_8, %c0_9] : memref<3x128x128xbf16, #tpu.memory_space<vmem>>, vector<1x128x128xbf16>
    %12 = vector.shape_cast %11 : vector<1x128x128xbf16> to vector<128x128xbf16>
    %cst_10 = arith.constant dense<0.000000e+00> : vector<8x128xf32>
    %13 = tpu.matmul %10, %12, %cst_10 {dimension_numbers = #tpu.dot_dimension_numbers<[1], [0], [0], [1], [0, 0, 1, 1], [], []>} : vector<8x128xbf16>, vector<128x128xbf16>, vector<8x128xf32> -> vector<8x128xf32>
    %c1_11 = arith.constant 1 : index
    %c0_12 = arith.constant 0 : index
    %c0_13 = arith.constant 0 : index
    %14 = vector.load %arg3[%c1_11, %c0_12, %c0_13] : memref<3x1x128xf32, #tpu.memory_space<vmem>>, vector<1x1x128xf32>
    %15 = vector.shape_cast %14 : vector<1x1x128xf32> to vector<1x128xf32>
    %16 = vector.broadcast %15 : vector<1x128xf32> to vector<8x128xf32>
    %17 = arith.addf %13, %16 : vector<8x128xf32>
    %cst_14 = arith.constant 0.000000e+00 : f32
    %18 = vector.broadcast %cst_14 : f32 to vector<8x128xf32>
    %19 = arith.maximumf %17, %18 : vector<8x128xf32>
    %20 = arith.truncf %19 : vector<8x128xf32> to vector<8x128xbf16>
    %c2 = arith.constant 2 : index
    %c0_15 = arith.constant 0 : index
    %c0_16 = arith.constant 0 : index
    %21 = vector.load %arg2[%c2, %c0_15, %c0_16] : memref<3x128x128xbf16, #tpu.memory_space<vmem>>, vector<1x128x128xbf16>
    %22 = vector.shape_cast %21 : vector<1x128x128xbf16> to vector<128x128xbf16>
    %cst_17 = arith.constant dense<0.000000e+00> : vector<8x128xf32>
    %23 = tpu.matmul %20, %22, %cst_17 {dimension_numbers = #tpu.dot_dimension_numbers<[1], [0], [0], [1], [0, 0, 1, 1], [], []>} : vector<8x128xbf16>, vector<128x128xbf16>, vector<8x128xf32> -> vector<8x128xf32>
    %c2_18 = arith.constant 2 : index
    %c0_19 = arith.constant 0 : index
    %c0_20 = arith.constant 0 : index
    %24 = vector.load %arg3[%c2_18, %c0_19, %c0_20] : memref<3x1x128xf32, #tpu.memory_space<vmem>>, vector<1x1x128xf32>
    %25 = vector.shape_cast %24 : vector<1x1x128xf32> to vector<1x128xf32>
    %26 = vector.broadcast %25 : vector<1x128xf32> to vector<8x128xf32>
    %27 = arith.addf %23, %26 : vector<8x128xf32>
    %28 = vector.extract_strided_slice %27 {offsets = [0, 0], sizes = [8, 4], strides = [1, 1]} : vector<8x128xf32> to vector<8x4xf32>
    %c0_21 = arith.constant 0 : index
    %c0_22 = arith.constant 0 : index
    %29 = vector.load %arg4[%c0_21, %c0_22] : memref<8x4xf32, #tpu.memory_space<vmem>>, vector<8x4xf32>
    tpu.vector_store %arg4[%c0_21, %c0_22], %28 {strides = array<i32>} : memref<8x4xf32, #tpu.memory_space<vmem>>, vector<8x4xf32>,
    return
  }
  func.func @transform_0(%arg0: i32) -> (i32, i32) {
    %c0_i32 = arith.constant 0 : i32
    %c0_i32_0 = arith.constant 0 : i32
    return %arg0, %c0_i32 : i32, i32
  }
  func.func @transform_1(%arg0: i32) -> (i32, i32, i32) {
    %c0_i32 = arith.constant 0 : i32
    %c0_i32_0 = arith.constant 0 : i32
    %c0_i32_1 = arith.constant 0 : i32
    %c0_i32_2 = arith.constant 0 : i32
    return %c0_i32, %c0_i32_0, %c0_i32_1 : i32, i32, i32
  }
  func.func @transform_2(%arg0: i32) -> (i32, i32, i32) {
    %c0_i32 = arith.constant 0 : i32
    %c0_i32_0 = arith.constant 0 : i32
    %c0_i32_1 = arith.constant 0 : i32
    %c0_i32_2 = arith.constant 0 : i32
    return %c0_i32, %c0_i32_0, %c0_i32_1 : i32, i32, i32
  }
  func.func @transform_3(%arg0: i32) -> (i32, i32) {
    %c0_i32 = arith.constant 0 : i32
    %c0_i32_0 = arith.constant 0 : i32
    return %arg0, %c0_i32 : i32, i32
  }
}

</mosaic_0001>

<llo_original>
// kernel: dqn_forward.1
$region0: #{dqn_forward.1}
  #allocation0 [shape = 'u32[]', space=smem, size = 0x4, offset = 0x4, fixed_abs, tag = 'smem constant byte address 0x4 - core index']
  #allocation1 [shape = 'u32[144,128]{1,0:T(1,128)}', space=vmem, size = 0x12000, scoped, tag = 'internal scratch']
  %s0 = inlined_call_operand.vmem [shape: bf16[8,8], index: 0, kind: input, shape index: {}]
  %s1 = inlined_call_operand.hbm [shape: bf16[3,128,128], index: 1, kind: input, shape index: {}]
  %s2 = inlined_call_operand.vmem [shape: f32[3,1,128], index: 2, kind: input, shape index: {}]
  %s3 = inlined_call_operand.vmem [shape: f32[8,4], index: 3, kind: output, shape index: {}]
  %s4 = sld [smem:[#allocation0]]
  $region26: #{dqn_forward.1} parent=0
    _
  %s6 = ssub.s32 1, %s4
  %s7 = scalar_select 0, %s6, %s4
  $region1: #{dqn_forward.1} parent=0
    #allocation2 [shape = 'u8[98304]{0}', space=vmem, size = 0x18000, scoped, tag = 'input window, operand 1, single buffered']
    #allocation3 [shape = 's32[1]{0}', space=sflag, size = 0x4, scoped, tag = 'scoped memory for dqn_forward.1']
    %8 = vsyncpa [#allocation3], 0
    // Predicated region
    $region2: #{dqn_forward.1} parent=1 // pred_check
      _
    $region3: #{dqn_forward.1} parent=1 // pred_check_branch
      %10 = sbr.rel (0) target = $region5
    $region4: #{dqn_forward.1} parent=1 // pred_region
      _
    $region5: #{dqn_forward.1} parent=1 // pred_fallthru
      _
    // Predicated region
    $region6: #{dqn_forward.1} parent=1 // pred_check
      _
    $region7: #{dqn_forward.1} parent=1 // pred_check_branch
      %12 = sbr.rel (0) target = $region9
    $region8: #{dqn_forward.1} parent=1 // pred_region
      %s14 = ssub.s32 3072, 3072
      %15 = vsyncadd [#allocation3], %s14
      %s16 = sshll.u32 [#allocation2], 4
      %s17 = int_to_ptr.vmem [resolvable:$true] %s16
      %22 = dma.hbm_to_vmem [thread:$0]  %s1, 3072, %s17, [#allocation3], 64, 64, 4
    $region9: #{dqn_forward.1} parent=1 // pred_fallthru
      _
    // Predicated region
    $region10: #{dqn_forward.1} parent=1 // pred_check
      _
    $region11: #{dqn_forward.1} parent=1 // pred_check_branch
      %24 = sbr.rel (0) target = $region13
    $region12: #{dqn_forward.1} parent=1 // pred_region
      _
    $region13: #{dqn_forward.1} parent=1 // pred_fallthru
      _
    // Predicated region
    $region14: #{dqn_forward.1} parent=1 // pred_check
      _
    $region15: #{dqn_forward.1} parent=1 // pred_check_branch
      %26 = sbr.rel (0) target = $region17
    $region16: #{dqn_forward.1} parent=1 // pred_region
      %27 = dma.done [#allocation3], 3072
    $region17: #{dqn_forward.1} parent=1 // pred_fallthru
      _
    %v29 = vld [vmem:[%s0] sm:$0xf]
    %v30 = vld [vmem:[#allocation2] sm:$0xf]
    %v31 = vld [vmem:[%s2] sm:$0x1]
    %v33 = vlaneseq
    %v34 = vshrl.u32 %v33, 7
    %v35 = vsub.s32 0, %v34
    %v36 = vrot.slane %v31, %v35
    %vm38 = vcmask 64512
    %v40 = vsel %vm38, %v29, 0
    %vm42 = vcmask 1043456
    %v44 = vsel %vm42, %v30, 0
    %46 = vmatprep.subr.bf16.mxu0 0
    %47 = vmatpush1.bf16.msra.mxu0 0
    %48 = vmatprep.subr.bf16.mxu0 0
    %49 = vmatpush1.bf16.msra.mxu0 0
    %50 = vmatprep.subr.bf16.mxu0 0
    %51 = vmatpush1.bf16.msra.mxu0 0
    %52 = vmatprep.subr.bf16.mxu0 0
    %53 = vmatpush1.bf16.msra.mxu0 0
    %54 = vmatprep.subr.bf16.mxu0 0
    %55 = vmatpush1.bf16.msra.mxu0 0
    %56 = vmatprep.subr.bf16.mxu0 0
    %57 = vmatpush1.bf16.msra.mxu0 0
    %58 = vmatprep.subr.bf16.mxu0 0
    %59 = vmatpush1.bf16.msra.mxu0 0
    %60 = vmatprep.subr.bf16.mxu0 0
    %61 = vmatpush1.bf16.msra.mxu0 %v44
    %62 = vmatprep.subr.bf16.mxu0 0
    %63 = vmatpush2.bf16.msra.mxu0 0
    %64 = vmatprep.subr.bf16.mxu0 0
    %65 = vmatpush2.bf16.msra.mxu0 0
    %66 = vmatprep.subr.bf16.mxu0 0
    %67 = vmatpush2.bf16.msra.mxu0 0
    %68 = vmatprep.subr.bf16.mxu0 0
    %69 = vmatpush2.bf16.msra.mxu0 0
    %70 = vmatprep.subr.bf16.mxu0 0
    %71 = vmatpush2.bf16.msra.mxu0 0
    %72 = vmatprep.subr.bf16.mxu0 0
    %73 = vmatpush2.bf16.msra.mxu0 0
    %74 = vmatprep.subr.bf16.mxu0 0
    %75 = vmatpush2.bf16.msra.mxu0 0
    %76 = vmatprep.subr.bf16.mxu0 0
    %77 = vmatpush2.bf16.msra.mxu0 0
    %78 = vmatprep.mubr.bf16.mxu0 0
    %79 = vmatmul.mubr.bf16.gmra.mxu0 %v40
    %v80 = vpop.f32.mrf.mxu0
    %v81 = vadd.f32 %v36, %v80
    %v82 = vpop.f32.mrf.mxu0
    %v83 = vpop.f32.mrf.mxu0
    %v84 = vpop.f32.mrf.mxu0
    %85 = vdwg.mxu0
    %v86 = vmax.f32 %v81, 0.0
    %v87 = vpack.c.bf16 %v86, %v86
    %s88 = scalar_lea.vmem [#allocation2], 64
    %v89 = vld [vmem:[%s88] sm:$0xf]
    %v90 = vld [vmem:[%s88 + $0x4] sm:$0xf]
    %v91 = vld [vmem:[%s88 + $0x8] sm:$0xf]
    %v92 = vld [vmem:[%s88 + $0xc] sm:$0xf]
    %v93 = vld [vmem:[%s88 + $0x10] sm:$0xf]
    %v94 = vld [vmem:[%s88 + $0x14] sm:$0xf]
    %v95 = vld [vmem:[%s88 + $0x18] sm:$0xf]
    %v96 = vld [vmem:[%s88 + $0x1c] sm:$0xf]
    %v97 = vld [vmem:[%s88 + $0x20] sm:$0xf]
    %v98 = vld [vmem:[%s88 + $0x24] sm:$0xf]
    %v99 = vld [vmem:[%s88 + $0x28] sm:$0xf]
    %v100 = vld [vmem:[%s88 + $0x2c] sm:$0xf]
    %v101 = vld [vmem:[%s88 + $0x30] sm:$0xf]
    %v102 = vld [vmem:[%s88 + $0x34] sm:$0xf]
    %v103 = vld [vmem:[%s88 + $0x38] sm:$0xf]
    %v104 = vld [vmem:[%s88 + $0x3c] sm:$0xf]
    %s105 = scalar_lea.vmem %s2, 1
    %v106 = vld [vmem:[%s105] sm:$0x1]
    %v108 = vlaneseq
    %v109 = vshrl.u32 %v108, 7
    %v110 = vsub.s32 0, %v109
    %v111 = vrot.slane %v106, %v110
    %v129 = vunpack.c.l.b16 %v89
    %v130 = vunpack.c.l.b16 %v90
    %v131 = vunpack.c.l.b16 %v91
    %v132 = vunpack.c.l.b16 %v92
    %v133 = vunpack.c.l.b16 %v93
    %v134 = vunpack.c.l.b16 %v94
    %v135 = vunpack.c.l.b16 %v95
    %v136 = vunpack.c.l.b16 %v96
    %v137 = vunpack.c.l.b16 %v97
    %v138 = vunpack.c.l.b16 %v98
    %v139 = vunpack.c.l.b16 %v99
    %v140 = vunpack.c.l.b16 %v100
    %v141 = vunpack.c.l.b16 %v101
    %v142 = vunpack.c.l.b16 %v102
    %v143 = vunpack.c.l.b16 %v103
    %v144 = vunpack.c.l.b16 %v104
    %v145 = vpack.c.b16 %v130, %v129
    %v146 = vpack.c.b16 %v132, %v131
    %v147 = vpack.c.b16 %v134, %v133
    %v148 = vpack.c.b16 %v136, %v135
    %v149 = vpack.c.b16 %v138, %v137
    %v150 = vpack.c.b16 %v140, %v139
    %v151 = vpack.c.b16 %v142, %v141
    %v152 = vpack.c.b16 %v144, %v143
    %161 = vmatprep.subr.bf16.mxu0 0
    %162 = vmatpush1.bf16.msra.mxu0 %v152
    %163 = vmatprep.subr.bf16.mxu0 0
    %164 = vmatpush1.bf16.msra.mxu0 %v151
    %165 = vmatprep.subr.bf16.mxu0 0
    %166 = vmatpush1.bf16.msra.mxu0 %v150
    %167 = vmatprep.subr.bf16.mxu0 0
    %168 = vmatpush1.bf16.msra.mxu0 %v149
    %169 = vmatprep.subr.bf16.mxu0 0
    %170 = vmatpush1.bf16.msra.mxu0 %v148
    %171 = vmatprep.subr.bf16.mxu0 0
    %172 = vmatpush1.bf16.msra.mxu0 %v147
    %173 = vmatprep.subr.bf16.mxu0 0
    %174 = vmatpush1.bf16.msra.mxu0 %v146
    %175 = vmatprep.subr.bf16.mxu0 0
    %176 = vmatpush1.bf16.msra.mxu0 %v145
    %177 = vmatprep.subr.bf16.mxu0 0
    %178 = vmatpush2.bf16.msra.mxu0 0
    %179 = vmatprep.subr.bf16.mxu0 0
    %180 = vmatpush2.bf16.msra.mxu0 0
    %181 = vmatprep.subr.bf16.mxu0 0
    %182 = vmatpush2.bf16.msra.mxu0 0
    %183 = vmatprep.subr.bf16.mxu0 0
    %184 = vmatpush2.bf16.msra.mxu0 0
    %185 = vmatprep.subr.bf16.mxu0 0
    %186 = vmatpush2.bf16.msra.mxu0 0
    %187 = vmatprep.subr.bf16.mxu0 0
    %188 = vmatpush2.bf16.msra.mxu0 0
    %189 = vmatprep.subr.bf16.mxu0 0
    %190 = vmatpush2.bf16.msra.mxu0 0
    %191 = vmatprep.subr.bf16.mxu0 0
    %192 = vmatpush2.bf16.msra.mxu0 0
    %193 = vmatprep.mubr.bf16.mxu0 0
    %194 = vmatmul.mubr.bf16.gmra.mxu0 %v87
    %v195 = vpop.f32.mrf.mxu0
    %v196 = vadd.f32 %v111, %v195
    %v197 = vpop.f32.mrf.mxu0
    %v198 = vpop.f32.mrf.mxu0
    %v199 = vpop.f32.mrf.mxu0
    %200 = vdwg.mxu0
    %v201 = vmax.f32 %v196, 0.0
    %v202 = vpack.c.bf16 %v201, %v201
    %s203 = scalar_lea.vmem [#allocation2], 128
    %v204 = vld [vmem:[%s203] sm:$0xf]
    %v205 = vld [vmem:[%s203 + $0x4] sm:$0xf]
    %v206 = vld [vmem:[%s203 + $0x8] sm:$0xf]
    %v207 = vld [vmem:[%s203 + $0xc] sm:$0xf]
    %v208 = vld [vmem:[%s203 + $0x10] sm:$0xf]
    %v209 = vld [vmem:[%s203 + $0x14] sm:$0xf]
    %v210 = vld [vmem:[%s203 + $0x18] sm:$0xf]
    %v211 = vld [vmem:[%s203 + $0x1c] sm:$0xf]
    %v212 = vld [vmem:[%s203 + $0x20] sm:$0xf]
    %v213 = vld [vmem:[%s203 + $0x24] sm:$0xf]
    %v214 = vld [vmem:[%s203 + $0x28] sm:$0xf]
    %v215 = vld [vmem:[%s203 + $0x2c] sm:$0xf]
    %v216 = vld [vmem:[%s203 + $0x30] sm:$0xf]
    %v217 = vld [vmem:[%s203 + $0x34] sm:$0xf]
    %v218 = vld [vmem:[%s203 + $0x38] sm:$0xf]
    %v219 = vld [vmem:[%s203 + $0x3c] sm:$0xf]
    %s220 = scalar_lea.vmem %s2, 2
    %v221 = vld [vmem:[%s220] sm:$0x1]
    %v223 = vlaneseq
    %v224 = vshrl.u32 %v223, 7
    %v225 = vsub.s32 0, %v224
    %v226 = vrot.slane %v221, %v225
    %v244 = vunpack.c.l.b16 %v204
    %v245 = vunpack.c.l.b16 %v205
    %v246 = vunpack.c.l.b16 %v206
    %v247 = vunpack.c.l.b16 %v207
    %v248 = vunpack.c.l.b16 %v208
    %v249 = vunpack.c.l.b16 %v209
    %v250 = vunpack.c.l.b16 %v210
    %v251 = vunpack.c.l.b16 %v211
    %v252 = vunpack.c.l.b16 %v212
    %v253 = vunpack.c.l.b16 %v213
    %v254 = vunpack.c.l.b16 %v214
    %v255 = vunpack.c.l.b16 %v215
    %v256 = vunpack.c.l.b16 %v216
    %v257 = vunpack.c.l.b16 %v217
    %v258 = vunpack.c.l.b16 %v218
    %v259 = vunpack.c.l.b16 %v219
    %v260 = vpack.c.b16 %v245, %v244
    %v261 = vpack.c.b16 %v247, %v246
    %v262 = vpack.c.b16 %v249, %v248
    %v263 = vpack.c.b16 %v251, %v250
    %v264 = vpack.c.b16 %v253, %v252
    %v265 = vpack.c.b16 %v255, %v254
    %v266 = vpack.c.b16 %v257, %v256
    %v267 = vpack.c.b16 %v259, %v258
    %276 = vmatprep.subr.bf16.mxu0 0
    %277 = vmatpush1.bf16.msra.mxu0 %v267
    %278 = vmatprep.subr.bf16.mxu0 0
    %279 = vmatpush1.bf16.msra.mxu0 %v266
    %280 = vmatprep.subr.bf16.mxu0 0
    %281 = vmatpush1.bf16.msra.mxu0 %v265
    %282 = vmatprep.subr.bf16.mxu0 0
    %283 = vmatpush1.bf16.msra.mxu0 %v264
    %284 = vmatprep.subr.bf16.mxu0 0
    %285 = vmatpush1.bf16.msra.mxu0 %v263
    %286 = vmatprep.subr.bf16.mxu0 0
    %287 = vmatpush1.bf16.msra.mxu0 %v262
    %288 = vmatprep.subr.bf16.mxu0 0
    %289 = vmatpush1.bf16.msra.mxu0 %v261
    %290 = vmatprep.subr.bf16.mxu0 0
    %291 = vmatpush1.bf16.msra.mxu0 %v260
    %292 = vmatprep.subr.bf16.mxu0 0
    %293 = vmatpush2.bf16.msra.mxu0 0
    %294 = vmatprep.subr.bf16.mxu0 0
    %295 = vmatpush2.bf16.msra.mxu0 0
    %296 = vmatprep.subr.bf16.mxu0 0
    %297 = vmatpush2.bf16.msra.mxu0 0
    %298 = vmatprep.subr.bf16.mxu0 0
    %299 = vmatpush2.bf16.msra.mxu0 0
    %300 = vmatprep.subr.bf16.mxu0 0
    %301 = vmatpush2.bf16.msra.mxu0 0
    %302 = vmatprep.subr.bf16.mxu0 0
    %303 = vmatpush2.bf16.msra.mxu0 0
    %304 = vmatprep.subr.bf16.mxu0 0
    %305 = vmatpush2.bf16.msra.mxu0 0
    %306 = vmatprep.subr.bf16.mxu0 0
    %307 = vmatpush2.bf16.msra.mxu0 0
    %308 = vmatprep.mubr.bf16.mxu0 0
    %309 = vmatmul.mubr.bf16.gmra.mxu0 %v202
    %v310 = vpop.f32.mrf.mxu0
    %v311 = vadd.f32 %v226, %v310
    %v312 = vpop.f32.mrf.mxu0
    %v313 = vpop.f32.mrf.mxu0
    %v314 = vpop.f32.mrf.mxu0
    %315 = vdwg.mxu0
    %vm316 = vcmask 31744
    %317 = vst.msk [vmem:[%s3] sm:$0xff] %vm316, %v311
    // Predicated region
    $region18: #{dqn_forward.1} parent=1 // pred_check
      _
    $region19: #{dqn_forward.1} parent=1 // pred_check_branch
      %319 = sbr.rel (0) target = $region21
    $region20: #{dqn_forward.1} parent=1 // pred_region
      _
    $region21: #{dqn_forward.1} parent=1 // pred_fallthru
      _
    // Predicated region
    $region22: #{dqn_forward.1} parent=1 // pred_check
      _
    $region23: #{dqn_forward.1} parent=1 // pred_check_branch
      %321 = sbr.rel (0) target = $region25
    $region24: #{dqn_forward.1} parent=1 // pred_region
      _
    $region25: #{dqn_forward.1} parent=1 // pred_fallthru
      _
    %322 = vsyncpa [#allocation3], 1

</llo_original>
